<compile_context>
chip_gen: v6e
topology: v6e:2x2x1
jax: 0.10.0
libtpu: 0.0.40
codegen_flags: <defaults>
</compile_context>

<pallas_src>
import functools

import jax
import jax.numpy as jnp
import numpy as np
from jax.experimental import pallas as pl
from jax.experimental.pallas import tpu as pltpu


def _round_up(x: int, m: int) -> int:
    return ((x + m - 1) // m) * m


def _pick_tile(hw: int, per_lane_bytes: int, cap: int, budget_bytes: int) -> int:
    """Largest 128-multiple lane tile fitting the per-step VMEM budget."""
    tn = budget_bytes // max(per_lane_bytes, 1)
    tn = min(tn, cap, _round_up(hw, 128))
    tn = max(128, (tn // 128) * 128)
    return int(tn)


# --------------------------------------------------------------------------
# Kernel 1: per-pixel teacher entropy + per-pixel cross-entropy NLL.
# Blocks: pt_ref, pred_ref -> (1, C, TN); tgt_ref -> (1, 1, TN) int32.
# Channels on sublane, pixels on lane; reductions are over the channel axis.
# Ragged tail lanes of the last tile may compute on garbage, but those lanes
# are never written back (out_shape is exactly (b, 1, hw)).
# --------------------------------------------------------------------------
def _pixel_stats_kernel(pt_ref, pred_ref, tgt_ref, ent_ref, nll_ref, *, eps):
    p = pt_ref[...].astype(jnp.float32)                                # (1,C,TN)
    ent_ref[...] = -jnp.sum(p * jnp.log(p + eps), axis=1, keepdims=True)

    x = pred_ref[...].astype(jnp.float32)                              # (1,C,TN)
    m = jnp.max(x, axis=1, keepdims=True)                              # (1,1,TN)
    lse = jnp.log(jnp.sum(jnp.exp(x - m), axis=1, keepdims=True)) + m  # (1,1,TN)
    cls = jax.lax.broadcasted_iota(jnp.int32, x.shape, 1)              # channel
    x_t = jnp.sum(jnp.where(cls == tgt_ref[...], x, 0.0),
                  axis=1, keepdims=True)                               # x[target]
    # NOTE: pixels whose target is outside [0, C) (e.g. already 255) match no
    # channel, so nll == lse there; they are masked out in pass 2.
    nll_ref[...] = lse - x_t


# --------------------------------------------------------------------------
# Kernel 2: fused drop decision + masked (ignore_index=255) loss reduction.
# Per-class effective thresholds (inf when the '>10' gate is off) are read as
# scalars from SMEM; drop mask rebuilt with a C-way select chain (free VPU
# filler on a DMA-bound pass).  Lane-shaped accumulators; single cross-lane
# reduce at the last pixel step.  Ragged last tile masked via lane iota.
# --------------------------------------------------------------------------
def _masked_loss_kernel(thr_ref, ent_ref, nll_ref, tgt_ref,
                        nll_out_ref, cnt_out_ref, nll_acc, cnt_acc,
                        *, num_classes, hw, tn, ragged):
    j = pl.program_id(1)

    @pl.when(j == 0)
    def _():
        nll_acc[...] = jnp.zeros_like(nll_acc)
        cnt_acc[...] = jnp.zeros_like(cnt_acc)

    tgt = tgt_ref[...]                                                 # (1,1,TN)
    ent = ent_ref[...]                                                 # (1,1,TN)

    # Per-pixel threshold lookup via select chain (classes not in [0,C) and
    # gated-off classes keep +inf => never dropped).  For very large C this
    # could be replaced by a one-hot(tgt) x thr MXU matmul.
    thr_px = jnp.full(tgt.shape, jnp.inf, dtype=jnp.float32)
    for i in range(num_classes):
        thr_px = jnp.where(tgt == i, thr_ref[i], thr_px)

    drop = ent >= thr_px
    valid = (tgt != 255) & jnp.logical_not(drop)
    if ragged:
        lane = jax.lax.broadcasted_iota(jnp.int32, tgt.shape, 2)
        valid = valid & ((j * tn + lane) < hw)

    # where() (not multiply) so garbage/NaN in masked lanes cannot leak in.
    nll_acc[...] += jnp.where(valid, nll_ref[...], 0.0)
    cnt_acc[...] += valid.astype(jnp.float32)

    @pl.when(j == pl.num_programs(1) - 1)
    def _():
        nll_out_ref[...] = jnp.sum(nll_acc[...], keepdims=True)        # (1,1,1)
        cnt_out_ref[...] = jnp.sum(cnt_acc[...], keepdims=True)        # (1,1,1)


@functools.partial(jax.jit, static_argnames=("drop_percent", "eps",
                                              "max_tile_pass1", "max_tile_pass2"))
def pseudo_label_loss(pred, target, drop_percent, prob_teacher,
                      *, eps=1e-6, max_tile_pass1=8192, max_tile_pass2=32768):
    b, c, h, w = pred.shape
    hw = h * w
    n_total = b * hw

    # Free reshapes of NCHW: channels -> sublane, pixels -> lane.
    pred3 = pred.reshape(b, c, hw)
    pt3 = prob_teacher.reshape(b, c, hw)
    tgt3 = target.astype(jnp.int32).reshape(b, 1, hw)

    # Generation-aware VMEM budget (v7x: 64 MiB physical; v5e/v6e: 128 MiB).
    try:
        vmem_cap = int(pltpu.get_tpu_info().vmem_capacity_bytes)
    except Exception:
        vmem_cap = 64 * 1024 * 1024
    budget = int(vmem_cap * 0.55)
    vmem_limit = int(vmem_cap * 0.8)

    isz = jnp.dtype(pred.dtype).itemsize + jnp.dtype(prob_teacher.dtype).itemsize
    # pass 1 per lane: 2 double-buffered (C,TN) inputs + tgt + 2 f32 outputs
    per_lane1 = 2 * c * isz + 2 * 4 + 4 * 4
    tn1 = _pick_tile(hw, per_lane1, max_tile_pass1, budget)
    # pass 2 per lane: 3 double-buffered (1,TN) inputs + 2 f32 accumulators
    tn2 = _pick_tile(hw, 3 * 2 * 4 + 2 * 4, max_tile_pass2, budget)
    grid1 = (b, pl.cdiv(hw, tn1))
    grid2 = (b, pl.cdiv(hw, tn2))

    # ---- Pass 1: per-pixel entropy + NLL ---------------------------------
    ent, nll = pl.pallas_call(
        functools.partial(_pixel_stats_kernel, eps=float(eps)),
        out_shape=(jax.ShapeDtypeStruct((b, 1, hw), jnp.float32),
                   jax.ShapeDtypeStruct((b, 1, hw), jnp.float32)),
        grid_spec=pltpu.PrefetchScalarGridSpec(
            num_scalar_prefetch=0,
            grid=grid1,
            in_specs=[pl.BlockSpec((1, c, tn1), lambda i, j: (i, 0, j)),
                      pl.BlockSpec((1, c, tn1), lambda i, j: (i, 0, j)),
                      pl.BlockSpec((1, 1, tn1), lambda i, j: (i, 0, j))],
            out_specs=[pl.BlockSpec((1, 1, tn1), lambda i, j: (i, 0, j)),
                       pl.BlockSpec((1, 1, tn1), lambda i, j: (i, 0, j))]),
        compiler_params=pltpu.CompilerParams(
            dimension_semantics=("parallel", "parallel"),
            vmem_limit_bytes=vmem_limit),
    )(pt3, pred3, tgt3)

    # ---- Per-class percentile thresholds: ONE sort + segment reduce -------
    # TODO(synk): np.percentile over the data-dependent subsets
    # entropy[target == i] has no clean Pallas equivalent; done as a single
    # lexicographic lax.sort on (class, entropy) + segment sums in XLA glue.
    ent_flat = ent.reshape(-1)
    tgt_flat = tgt3.reshape(-1)
    q = float(drop_percent) / 100.0

    sorted_ent = jax.lax.sort((tgt_flat, ent_flat), num_keys=2)[1]
    nseg = 256                                    # classes 0..c-1 plus 255
    counts = jax.ops.segment_sum(jnp.ones_like(tgt_flat), tgt_flat,
                                 num_segments=nseg)
    ent_sums = jax.ops.segment_sum(ent_flat, tgt_flat, num_segments=nseg)
    starts = (jnp.cumsum(counts) - counts)[:c]
    n_i = counts[:c].astype(jnp.float32)

    pos = q * jnp.maximum(n_i - 1.0, 0.0)         # np.percentile 'linear'
    lo = jnp.floor(pos).astype(jnp.int32)
    hi = jnp.ceil(pos).astype(jnp.int32)
    frac = pos - lo.astype(jnp.float32)
    lo_v = sorted_ent[starts + lo]
    hi_v = sorted_ent[starts + hi]
    thresh = lo_v * (1.0 - frac) + hi_v * frac                       # f32[c]
    # Fold the 'sum(entropy) > 10' gate in: gated-off classes never drop.
    thresh_eff = jnp.where(ent_sums[:c] > 10.0, thresh,
                           jnp.inf).astype(jnp.float32)

    # ---- Pass 2: fused drop decision + masked loss reduction --------------
    # TODO(synk): for b == 1 on v7x the pixel axis could be split in two
    # 'parallel' chunks to keep both TensorCores busy.
    nll_sum, cnt_sum = pl.pallas_call(
        functools.partial(_masked_loss_kernel, num_classes=c, hw=hw,
                          tn=tn2, ragged=(hw % tn2) != 0),
        out_shape=(jax.ShapeDtypeStruct((b, 1, 1), jnp.float32),
                   jax.ShapeDtypeStruct((b, 1, 1), jnp.float32)),
        grid_spec=pltpu.PrefetchScalarGridSpec(
            num_scalar_prefetch=0,
            grid=grid2,
            in_specs=[pl.BlockSpec(memory_space=pltpu.MemorySpace.SMEM),  # thr
                      pl.BlockSpec((1, 1, tn2), lambda i, j: (i, 0, j)),
                      pl.BlockSpec((1, 1, tn2), lambda i, j: (i, 0, j)),
                      pl.BlockSpec((1, 1, tn2), lambda i, j: (i, 0, j))],
            out_specs=[pl.BlockSpec((1, 1, 1), lambda i, j: (i, 0, 0)),
                       pl.BlockSpec((1, 1, 1), lambda i, j: (i, 0, 0))],
            scratch_shapes=[pltpu.VMEM((1, 1, tn2), jnp.float32),
                            pltpu.VMEM((1, 1, tn2), jnp.float32)]),
        compiler_params=pltpu.CompilerParams(
            dimension_semantics=("parallel", "arbitrary"),
            vmem_limit_bytes=vmem_limit),
    )(thresh_eff, ent, nll, tgt3)

    total_nll = jnp.sum(nll_sum)
    count = jnp.sum(cnt_sum)
    # NOTE: matches the reference -- if every pixel is dropped this is inf/nan.
    weight = n_total / count
    return (weight * (total_nll / count)).astype(jnp.float32)


# --------------------------------------------------------------------------
# Independent reference (numpy), mirroring the PyTorch module literally.
# --------------------------------------------------------------------------
def _reference(pred, target, drop_percent, prob_teacher, eps=1e-6):
    pred_np = np.array(pred, dtype=np.float64)
    tgt = np.array(target)
    pt = np.array(prob_teacher)                       # float32, matches kernel
    b, c, h, w = pred_np.shape
    entropy = -np.sum(pt * np.log(pt + eps), axis=1)  # (b,h,w) float32
    for i in range(c):
        if np.sum(entropy[tgt == i]) > 10:
            thresh = np.percentile(entropy[tgt == i].flatten(), drop_percent)
            thresh_mask = (entropy >= thresh) & (tgt == i)
            tgt[thresh_mask] = 255
    valid = tgt != 255
    weight = (b * h * w) / np.sum(valid)
    x = pred_np.transpose(0, 2, 3, 1).reshape(-1, c)
    t = tgt.reshape(-1)
    m = x.max(axis=1, keepdims=True)
    lse = np.log(np.sum(np.exp(x - m), axis=1)) + m[:, 0]
    x_t = x[np.arange(x.shape[0]), np.clip(t, 0, c - 1)]
    nll = lse - x_t
    vflat = valid.reshape(-1)
    ce = np.sum(nll[vflat]) / np.sum(vflat)
    return np.float32(weight * ce)


if __name__ == "__main__":
    key = jax.random.PRNGKey(0)
    k1, k2, k3 = jax.random.split(key, 3)
    b, c, h, w = 2, 4, 16, 16
    pred = jax.random.normal(k1, (b, c, h, w), dtype=jnp.float32)
    prob_teacher = jax.nn.softmax(
        jax.random.normal(k2, (b, c, h, w), dtype=jnp.float32), axis=1)
    target = jax.random.randint(k3, (b, h, w), 0, c, dtype=jnp.int32)
    drop_percent = 80.0

    out = pseudo_label_loss(pred, target, drop_percent, prob_teacher)
    out = jax.block_until_ready(out)

    ref = _reference(pred, target, drop_percent, prob_teacher)
    assert jnp.allclose(out, ref, rtol=1e-4, atol=1e-5), (out, ref)

    print("KERNEL_OK")
</pallas_src>

<mosaic_0001>
module attributes {stable_mosaic.version = 11 : i64} {
  func.func private @main(%arg0: i32) attributes {dimension_semantics = [#tpu.dimension_semantics<core_parallel>], iteration_bounds = array<i64: 2>, tpu.core_type = #tpu.core_type<sc_scalar_subcore>, window_params = []} {
    return
  }
}

module attributes {stable_mosaic.version = 11 : i64} {
  func.func private @main(%arg0: i32) attributes {dimension_semantics = [#tpu.dimension_semantics<core_parallel>], iteration_bounds = array<i64: 2>, tpu.core_type = #tpu.core_type<sc_scalar_subcore>, window_params = []} {
    return
  }
}

module attributes {stable_mosaic.version = 11 : i64} {
  func.func @_pixel_stats_kernel(%arg0: i32, %arg1: i32, %arg2: memref<1x4x256xf32, #tpu.memory_space<vmem>>, %arg3: memref<1x4x256xf32, #tpu.memory_space<vmem>>, %arg4: memref<1x1x256xi32, #tpu.memory_space<vmem>>, %arg5: memref<1x1x256xf32, #tpu.memory_space<vmem>>, %arg6: memref<1x1x256xf32, #tpu.memory_space<vmem>>) attributes {dimension_semantics = [#tpu.dimension_semantics<parallel>, #tpu.dimension_semantics<parallel>], iteration_bounds = array<i64: 2, 1>, scalar_prefetch = 0 : i64, scratch_operands = 0 : i64, tpu.core_type = #tpu.core_type<tc>, window_params = [{transform_indices = @transform_0, window_bounds = array<i64: 1, 4, 256>}, {transform_indices = @transform_1, window_bounds = array<i64: 1, 4, 256>}, {transform_indices = @transform_2, window_bounds = array<i64: 1, 1, 256>}, {transform_indices = @transform_3, window_bounds = array<i64: 1, 1, 256>}, {transform_indices = @transform_4, window_bounds = array<i64: 1, 1, 256>}]} {
    %c0 = arith.constant 0 : index
    %c0_0 = arith.constant 0 : index
    %c0_1 = arith.constant 0 : index
    %0 = vector.load %arg2[%c0, %c0_0, %c0_1] : memref<1x4x256xf32, #tpu.memory_space<vmem>>, vector<1x4x256xf32>
    %cst = arith.constant 9.99999997E-7 : f32
    %1 = vector.broadcast %cst : f32 to vector<1x4x256xf32>
    %2 = arith.addf %0, %1 : vector<1x4x256xf32>
    %3 = math.log %2 : vector<1x4x256xf32>
    %4 = arith.mulf %0, %3 : vector<1x4x256xf32>
    %cst_2 = arith.constant dense<0.000000e+00> : vector<1x256xf32>
    %5 = vector.multi_reduction <add>, %4, %cst_2 [1] : vector<1x4x256xf32> to vector<1x256xf32>
    %6 = vector.shape_cast %5 : vector<1x256xf32> to vector<1x1x256xf32>
    %cst_3 = arith.constant 0.000000e+00 : f32
    %7 = vector.broadcast %cst_3 : f32 to vector<1x1x256xf32>
    %8 = arith.subf %7, %6 : vector<1x1x256xf32>
    %c0_4 = arith.constant 0 : index
    %c0_5 = arith.constant 0 : index
    %c0_6 = arith.constant 0 : index
    %9 = vector.load %arg5[%c0_4, %c0_5, %c0_6] : memref<1x1x256xf32, #tpu.memory_space<vmem>>, vector<1x1x256xf32>
    tpu.vector_store %arg5[%c0_4, %c0_5, %c0_6], %8 {strides = array<i32>} : memref<1x1x256xf32, #tpu.memory_space<vmem>>, vector<1x1x256xf32>,
    %c0_7 = arith.constant 0 : index
    %c0_8 = arith.constant 0 : index
    %c0_9 = arith.constant 0 : index
    %10 = vector.load %arg3[%c0_7, %c0_8, %c0_9] : memref<1x4x256xf32, #tpu.memory_space<vmem>>, vector<1x4x256xf32>
    %cst_10 = arith.constant dense<0xFF800000> : vector<1x256xf32>
    %11 = vector.multi_reduction <maximumf>, %10, %cst_10 [1] : vector<1x4x256xf32> to vector<1x256xf32>
    %12 = vector.shape_cast %11 : vector<1x256xf32> to vector<1x1x256xf32>
    %13 = vector.broadcast %12 : vector<1x1x256xf32> to vector<1x4x256xf32>
    %14 = arith.subf %10, %13 : vector<1x4x256xf32>
    %15 = math.exp %14 : vector<1x4x256xf32>
    %cst_11 = arith.constant dense<0.000000e+00> : vector<1x256xf32>
    %16 = vector.multi_reduction <add>, %15, %cst_11 [1] : vector<1x4x256xf32> to vector<1x256xf32>
    %17 = vector.shape_cast %16 : vector<1x256xf32> to vector<1x1x256xf32>
    %18 = math.log %17 : vector<1x1x256xf32>
    %19 = arith.addf %18, %12 : vector<1x1x256xf32>
    %20 = tpu.iota {dimensions = array<i32: 1>} : vector<1x4x256xi32>
    %c0_12 = arith.constant 0 : index
    %c0_13 = arith.constant 0 : index
    %c0_14 = arith.constant 0 : index
    %21 = vector.load %arg4[%c0_12, %c0_13, %c0_14] : memref<1x1x256xi32, #tpu.memory_space<vmem>>, vector<1x1x256xi32>
    %22 = vector.broadcast %21 : vector<1x1x256xi32> to vector<1x4x256xi32>
    %23 = arith.cmpi eq, %20, %22 : vector<1x4x256xi32>
    %cst_15 = arith.constant 0.000000e+00 : f32
    %24 = vector.broadcast %cst_15 : f32 to vector<1x4x256xf32>
    %25 = arith.select %23, %10, %24 : vector<1x4x256xi1>, vector<1x4x256xf32>
    %cst_16 = arith.constant dense<0.000000e+00> : vector<1x256xf32>
    %26 = vector.multi_reduction <add>, %25, %cst_16 [1] : vector<1x4x256xf32> to vector<1x256xf32>
    %27 = vector.shape_cast %26 : vector<1x256xf32> to vector<1x1x256xf32>
    %28 = arith.subf %19, %27 : vector<1x1x256xf32>
    %c0_17 = arith.constant 0 : index
    %c0_18 = arith.constant 0 : index
    %c0_19 = arith.constant 0 : index
    %29 = vector.load %arg6[%c0_17, %c0_18, %c0_19] : memref<1x1x256xf32, #tpu.memory_space<vmem>>, vector<1x1x256xf32>
    tpu.vector_store %arg6[%c0_17, %c0_18, %c0_19], %28 {strides = array<i32>} : memref<1x1x256xf32, #tpu.memory_space<vmem>>, vector<1x1x256xf32>,
    return
  }
  func.func @transform_0(%arg0: i32, %arg1: i32) -> (i32, i32, i32) {
    %c0_i32 = arith.constant 0 : i32
    %c0_i32_0 = arith.constant 0 : i32
    return %arg0, %c0_i32, %arg1 : i32, i32, i32
  }
  func.func @transform_1(%arg0: i32, %arg1: i32) -> (i32, i32, i32) {
    %c0_i32 = arith.constant 0 : i32
    %c0_i32_0 = arith.constant 0 : i32
    return %arg0, %c0_i32, %arg1 : i32, i32, i32
  }
  func.func @transform_2(%arg0: i32, %arg1: i32) -> (i32, i32, i32) {
    %c0_i32 = arith.constant 0 : i32
    %c0_i32_0 = arith.constant 0 : i32
    return %arg0, %c0_i32, %arg1 : i32, i32, i32
  }
  func.func @transform_3(%arg0: i32, %arg1: i32) -> (i32, i32, i32) {
    %c0_i32 = arith.constant 0 : i32
    %c0_i32_0 = arith.constant 0 : i32
    return %arg0, %c0_i32, %arg1 : i32, i32, i32
  }
  func.func @transform_4(%arg0: i32, %arg1: i32) -> (i32, i32, i32) {
    %c0_i32 = arith.constant 0 : i32
    %c0_i32_0 = arith.constant 0 : i32
    return %arg0, %c0_i32, %arg1 : i32, i32, i32
  }
}

module attributes {stable_mosaic.version = 11 : i64} {
  func.func @_masked_loss_kernel(%arg0: i32, %arg1: i32, %arg2: memref<4xf32, #tpu.memory_space<smem>>, %arg3: memref<1x1x256xf32, #tpu.memory_space<vmem>>, %arg4: memref<1x1x256xf32, #tpu.memory_space<vmem>>, %arg5: memref<1x1x256xi32, #tpu.memory_space<vmem>>, %arg6: memref<1x1x1xf32, #tpu.memory_space<vmem>>, %arg7: memref<1x1x1xf32, #tpu.memory_space<vmem>>, %arg8: memref<1x1x256xf32, #tpu.memory_space<vmem>>, %arg9: memref<1x1x256xf32, #tpu.memory_space<vmem>>) attributes {dimension_semantics = [#tpu.dimension_semantics<parallel>, #tpu.dimension_semantics<arbitrary>], iteration_bounds = array<i64: 2, 1>, scalar_prefetch = 0 : i64, scratch_operands = 2 : i64, tpu.core_type = #tpu.core_type<tc>, window_params = [{transform_indices = @transform_0, window_bounds = array<i64: 4>}, {transform_indices = @transform_1, window_bounds = array<i64: 1, 1, 256>}, {transform_indices = @transform_2, window_bounds = array<i64: 1, 1, 256>}, {transform_indices = @transform_3, window_bounds = array<i64: 1, 1, 256>}, {transform_indices = @transform_4, window_bounds = array<i64: 1, 1, 1>}, {transform_indices = @transform_5, window_bounds = array<i64: 1, 1, 1>}]} {
    %c0_i32 = arith.constant 0 : i32
    %0 = arith.cmpi eq, %arg1, %c0_i32 : i32
    %1 = arith.extui %0 : i1 to i32
    %c0_i32_0 = arith.constant 0 : i32
    %2 = arith.cmpi ne, %1, %c0_i32_0 : i32
    scf.if %2 {
      %cst_27 = arith.constant 0.000000e+00 : f32
      %45 = vector.broadcast %cst_27 : f32 to vector<1x1x256xf32>
      %c0_28 = arith.constant 0 : index
      %c0_29 = arith.constant 0 : index
      %c0_30 = arith.constant 0 : index
      %46 = vector.load %arg8[%c0_28, %c0_29, %c0_30] : memref<1x1x256xf32, #tpu.memory_space<vmem>>, vector<1x1x256xf32>
      tpu.vector_store %arg8[%c0_28, %c0_29, %c0_30], %45 {strides = array<i32>} : memref<1x1x256xf32, #tpu.memory_space<vmem>>, vector<1x1x256xf32>,
      %cst_31 = arith.constant 0.000000e+00 : f32
      %47 = vector.broadcast %cst_31 : f32 to vector<1x1x256xf32>
      %c0_32 = arith.constant 0 : index
      %c0_33 = arith.constant 0 : index
      %c0_34 = arith.constant 0 : index
      %48 = vector.load %arg9[%c0_32, %c0_33, %c0_34] : memref<1x1x256xf32, #tpu.memory_space<vmem>>, vector<1x1x256xf32>
      tpu.vector_store %arg9[%c0_32, %c0_33, %c0_34], %47 {strides = array<i32>} : memref<1x1x256xf32, #tpu.memory_space<vmem>>, vector<1x1x256xf32>,
    } else {
    }
    %c0 = arith.constant 0 : index
    %c0_1 = arith.constant 0 : index
    %c0_2 = arith.constant 0 : index
    %3 = vector.load %arg5[%c0, %c0_1, %c0_2] : memref<1x1x256xi32, #tpu.memory_space<vmem>>, vector<1x1x256xi32>
    %c0_3 = arith.constant 0 : index
    %c0_4 = arith.constant 0 : index
    %c0_5 = arith.constant 0 : index
    %4 = vector.load %arg3[%c0_3, %c0_4, %c0_5] : memref<1x1x256xf32, #tpu.memory_space<vmem>>, vector<1x1x256xf32>
    %cst = arith.constant 0x7F800000 : f32
    %5 = vector.broadcast %cst : f32 to vector<1x1x256xf32>
    %c0_i32_6 = arith.constant 0 : i32
    %6 = vector.broadcast %c0_i32_6 : i32 to vector<1x1x256xi32>
    %7 = arith.cmpi eq, %3, %6 : vector<1x1x256xi32>
    %c0_7 = arith.constant 0 : index
    %8 = memref.load %arg2[%c0_7] : memref<4xf32, #tpu.memory_space<smem>>
    %9 = vector.broadcast %8 : f32 to vector<1x1x256xf32>
    %10 = arith.select %7, %9, %5 : vector<1x1x256xi1>, vector<1x1x256xf32>
    %c1_i32 = arith.constant 1 : i32
    %11 = vector.broadcast %c1_i32 : i32 to vector<1x1x256xi32>
    %12 = arith.cmpi eq, %3, %11 : vector<1x1x256xi32>
    %c1 = arith.constant 1 : index
    %13 = memref.load %arg2[%c1] : memref<4xf32, #tpu.memory_space<smem>>
    %14 = vector.broadcast %13 : f32 to vector<1x1x256xf32>
    %15 = arith.select %12, %14, %10 : vector<1x1x256xi1>, vector<1x1x256xf32>
    %c2_i32 = arith.constant 2 : i32
    %16 = vector.broadcast %c2_i32 : i32 to vector<1x1x256xi32>
    %17 = arith.cmpi eq, %3, %16 : vector<1x1x256xi32>
    %c2 = arith.constant 2 : index
    %18 = memref.load %arg2[%c2] : memref<4xf32, #tpu.memory_space<smem>>
    %19 = vector.broadcast %18 : f32 to vector<1x1x256xf32>
    %20 = arith.select %17, %19, %15 : vector<1x1x256xi1>, vector<1x1x256xf32>
    %c3_i32 = arith.constant 3 : i32
    %21 = vector.broadcast %c3_i32 : i32 to vector<1x1x256xi32>
    %22 = arith.cmpi eq, %3, %21 : vector<1x1x256xi32>
    %c3 = arith.constant 3 : index
    %23 = memref.load %arg2[%c3] : memref<4xf32, #tpu.memory_space<smem>>
    %24 = vector.broadcast %23 : f32 to vector<1x1x256xf32>
    %25 = arith.select %22, %24, %20 : vector<1x1x256xi1>, vector<1x1x256xf32>
    %26 = arith.cmpf oge, %4, %25 : vector<1x1x256xf32>
    %c255_i32 = arith.constant 255 : i32
    %27 = vector.broadcast %c255_i32 : i32 to vector<1x1x256xi32>
    %28 = arith.cmpi ne, %3, %27 : vector<1x1x256xi32>
    %cst_8 = arith.constant dense<true> : vector<1x1x256xi1>
    %29 = arith.xori %26, %cst_8 : vector<1x1x256xi1>
    %30 = arith.andi %28, %29 : vector<1x1x256xi1>
    %c0_9 = arith.constant 0 : index
    %c0_10 = arith.constant 0 : index
    %c0_11 = arith.constant 0 : index
    %31 = vector.load %arg8[%c0_9, %c0_10, %c0_11] : memref<1x1x256xf32, #tpu.memory_space<vmem>>, vector<1x1x256xf32>
    %c0_12 = arith.constant 0 : index
    %c0_13 = arith.constant 0 : index
    %c0_14 = arith.constant 0 : index
    %32 = vector.load %arg4[%c0_12, %c0_13, %c0_14] : memref<1x1x256xf32, #tpu.memory_space<vmem>>, vector<1x1x256xf32>
    %cst_15 = arith.constant 0.000000e+00 : f32
    %33 = vector.broadcast %cst_15 : f32 to vector<1x1x256xf32>
    %34 = arith.select %30, %32, %33 : vector<1x1x256xi1>, vector<1x1x256xf32>
    %35 = arith.addf %31, %34 : vector<1x1x256xf32>
    %c0_16 = arith.constant 0 : index
    %c0_17 = arith.constant 0 : index
    %c0_18 = arith.constant 0 : index
    %36 = vector.load %arg8[%c0_16, %c0_17, %c0_18] : memref<1x1x256xf32, #tpu.memory_space<vmem>>, vector<1x1x256xf32>
    tpu.vector_store %arg8[%c0_16, %c0_17, %c0_18], %35 {strides = array<i32>} : memref<1x1x256xf32, #tpu.memory_space<vmem>>, vector<1x1x256xf32>,
    %c0_19 = arith.constant 0 : index
    %c0_20 = arith.constant 0 : index
    %c0_21 = arith.constant 0 : index
    %37 = vector.load %arg9[%c0_19, %c0_20, %c0_21] : memref<1x1x256xf32, #tpu.memory_space<vmem>>, vector<1x1x256xf32>
    %38 = arith.extui %30 : vector<1x1x256xi1> to vector<1x1x256xi32>
    %39 = arith.sitofp %38 : vector<1x1x256xi32> to vector<1x1x256xf32>
    %40 = arith.addf %37, %39 : vector<1x1x256xf32>
    %c0_22 = arith.constant 0 : index
    %c0_23 = arith.constant 0 : index
    %c0_24 = arith.constant 0 : index
    %41 = vector.load %arg9[%c0_22, %c0_23, %c0_24] : memref<1x1x256xf32, #tpu.memory_space<vmem>>, vector<1x1x256xf32>
    tpu.vector_store %arg9[%c0_22, %c0_23, %c0_24], %40 {strides = array<i32>} : memref<1x1x256xf32, #tpu.memory_space<vmem>>, vector<1x1x256xf32>,
    %c0_i32_25 = arith.constant 0 : i32
    %42 = arith.cmpi eq, %arg1, %c0_i32_25 : i32
    %43 = arith.extui %42 : i1 to i32
    %c0_i32_26 = arith.constant 0 : i32
    %44 = arith.cmpi ne, %43, %c0_i32_26 : i32
    scf.if %44 {
      %c0_27 = arith.constant 0 : index
      %c0_28 = arith.constant 0 : index
      %c0_29 = arith.constant 0 : index
      %45 = vector.load %arg8[%c0_27, %c0_28, %c0_29] : memref<1x1x256xf32, #tpu.memory_space<vmem>>, vector<1x1x256xf32>
      %46 = vector.shape_cast %45 : vector<1x1x256xf32> to vector<1x1x1x256xf32>
      %cst_30 = arith.constant dense<0.000000e+00> : vector<1xf32>
      %47 = vector.multi_reduction <add>, %46, %cst_30 [1, 2, 3] : vector<1x1x1x256xf32> to vector<1xf32>
      %48 = vector.shape_cast %47 : vector<1xf32> to vector<1x1x1x1xf32>
      %49 = vector.extract %48[0, 0, 0, 0] : f32 from vector<1x1x1x1xf32>
      %50 = vector.broadcast %49 : f32 to vector<1x1x1xf32>
      %c0_31 = arith.constant 0 : index
      %c0_32 = arith.constant 0 : index
      %c0_33 = arith.constant 0 : index
      %51 = vector.load %arg6[%c0_31, %c0_32, %c0_33] : memref<1x1x1xf32, #tpu.memory_space<vmem>>, vector<1x1x1xf32>
      tpu.vector_store %arg6[%c0_31, %c0_32, %c0_33], %50 {strides = array<i32>} : memref<1x1x1xf32, #tpu.memory_space<vmem>>, vector<1x1x1xf32>,
      %c0_34 = arith.constant 0 : index
      %c0_35 = arith.constant 0 : index
      %c0_36 = arith.constant 0 : index
      %52 = vector.load %arg9[%c0_34, %c0_35, %c0_36] : memref<1x1x256xf32, #tpu.memory_space<vmem>>, vector<1x1x256xf32>
      %53 = vector.shape_cast %52 : vector<1x1x256xf32> to vector<1x1x1x256xf32>
      %cst_37 = arith.constant dense<0.000000e+00> : vector<1xf32>
      %54 = vector.multi_reduction <add>, %53, %cst_37 [1, 2, 3] : vector<1x1x1x256xf32> to vector<1xf32>
      %55 = vector.shape_cast %54 : vector<1xf32> to vector<1x1x1x1xf32>
      %56 = vector.extract %55[0, 0, 0, 0] : f32 from vector<1x1x1x1xf32>
      %57 = vector.broadcast %56 : f32 to vector<1x1x1xf32>
      %c0_38 = arith.constant 0 : index
      %c0_39 = arith.constant 0 : index
      %c0_40 = arith.constant 0 : index
      %58 = vector.load %arg7[%c0_38, %c0_39, %c0_40] : memref<1x1x1xf32, #tpu.memory_space<vmem>>, vector<1x1x1xf32>
      tpu.vector_store %arg7[%c0_38, %c0_39, %c0_40], %57 {strides = array<i32>} : memref<1x1x1xf32, #tpu.memory_space<vmem>>, vector<1x1x1xf32>,
    } else {
    }
    return
  }
  func.func @transform_0(%arg0: i32, %arg1: i32) -> i32 {
    %c0_i32 = arith.constant 0 : i32
    %c0_i32_0 = arith.constant 0 : i32
    return %c0_i32 : i32
  }
  func.func @transform_1(%arg0: i32, %arg1: i32) -> (i32, i32, i32) {
    %c0_i32 = arith.constant 0 : i32
    %c0_i32_0 = arith.constant 0 : i32
    return %arg0, %c0_i32, %arg1 : i32, i32, i32
  }
  func.func @transform_2(%arg0: i32, %arg1: i32) -> (i32, i32, i32) {
    %c0_i32 = arith.constant 0 : i32
    %c0_i32_0 = arith.constant 0 : i32
    return %arg0, %c0_i32, %arg1 : i32, i32, i32
  }
  func.func @transform_3(%arg0: i32, %arg1: i32) -> (i32, i32, i32) {
    %c0_i32 = arith.constant 0 : i32
    %c0_i32_0 = arith.constant 0 : i32
    return %arg0, %c0_i32, %arg1 : i32, i32, i32
  }
  func.func @transform_4(%arg0: i32, %arg1: i32) -> (i32, i32, i32) {
    %c0_i32 = arith.constant 0 : i32
    %c0_i32_0 = arith.constant 0 : i32
    %c0_i32_1 = arith.constant 0 : i32
    return %arg0, %c0_i32, %c0_i32_0 : i32, i32, i32
  }
  func.func @transform_5(%arg0: i32, %arg1: i32) -> (i32, i32, i32) {
    %c0_i32 = arith.constant 0 : i32
    %c0_i32_0 = arith.constant 0 : i32
    %c0_i32_1 = arith.constant 0 : i32
    return %arg0, %c0_i32, %c0_i32_0 : i32, i32, i32
  }
}

</mosaic_0001>

<llo_original>
// kernel: pseudo_label_loss.2
$region0: #{pseudo_label_loss.2}
  #allocation0 [shape = 'u32[]', space=smem, size = 0x4, offset = 0x4, fixed_abs, tag = 'smem constant byte address 0x4 - core index']
  #allocation1 [shape = 'u32[144,128]{1,0:T(1,128)}', space=vmem, size = 0x12000, scoped, tag = 'internal scratch']
  %s0 = inlined_call_operand.vmem [shape: f32[2,4,256], index: 0, kind: input, shape index: {}]
  %s1 = inlined_call_operand.vmem [shape: f32[2,4,256], index: 1, kind: input, shape index: {}]
  %s2 = inlined_call_operand.vmem [shape: s32[2,1,256], index: 2, kind: input, shape index: {}]
  %s3 = inlined_call_operand.vmem [shape: f32[2,1,256], index: 3, kind: output, shape index: {0}]
  %s4 = inlined_call_operand.vmem [shape: f32[2,1,256], index: 4, kind: output, shape index: {1}]
  %5 = xla_tuple %s3, %s4
  %s6 = sld [smem:[#allocation0]]
  $region53: #{pseudo_label_loss.2} parent=0
    _
  %s8 = ssub.s32 1, %s6
  %s9 = scalar_select 0, %s8, %s6
  loop: start=0, step=1, limit=4
  $region2: #{pseudo_label_loss.2} parent=0 // loop_pre_header
    _
  $region3: #{pseudo_label_loss.2} parent=0 // loop_header
    %s11 = sphi 0, %s15
    %p12 = scmp.ge.s32.totalorder %s11, 4
    %s18 = sphi 0, %s30
    %s19 = sphi 0, %s26
    %s20 = sphi 0, %s18
    %s21 = sphi 0, %s19
    %s22 = sphi 0, %s20
    %s23 = sphi 0, %s21
    %s35 = sphi 0, %s37
    %s38 = sphi 0, %s35
    %s39 = sphi 0, %s38
    %s55 = sphi 0, %s39
    %s63 = sphi 0, %s65
    %s66 = sphi 0, %s63
    %s67 = sphi 0, %s66
    %s83 = sphi 0, %s67
    %s91 = sphi 0, %s93
    %s94 = sphi 0, %s91
    %s95 = sphi 0, %s94
    %s111 = sphi 0, %s95
    %s119 = sphi 0, %s121
    %s122 = sphi 0, %s119
    %s123 = sphi 0, %s122
    %s139 = sphi 0, %s123
    %s147 = sphi 0, %s149
    %s150 = sphi 0, %s147
    %s151 = sphi 0, %s150
    %s167 = sphi 0, %s151
  $region4: #{pseudo_label_loss.2} parent=0 // loop_header_branch
    %14 = sbr.rel (%p12) target = $region8
  $region5: #{pseudo_label_loss.2} parent=0 // loop_body
    %s16 = ssub.s32 %s11, 1
    %s17 = ssub.s32 %s11, 2
    %s24 = sadd.s32 1, %s19
    %p25 = scmp.ge.s32.totalorder %s24, 1
    %s26 = scalar_select %p25, 0, %s24
    %s27 = sadd.s32 1, %s18
    %s28 = scalar_select %p25, %s27, %s18
    %p29 = scmp.ge.s32.totalorder %s28, 2
    %s30 = scalar_select %p29, 0, %s28
    %s31 = ssub.s32 %s18, %s30
    %s32 = ssub.s32 %s19, %s26
    %s33 = sor.u32 %s31, %s32
    %p34 = scmp.eq.s32.totalorder %s33, 0
    %s36 = sadd.s32 %s35, 1
    %s37 = scalar_select %p34, %s35, %s36
    %p40 = pneg %p34
    %p41 = scmp.eq.s32.totalorder %s11, 1
    %p42 = por %p40, %p41
    %p43 = scmp.ne.s32.totalorder %s35, %s38
    %p44 = scmp.eq.s32.totalorder %s11, 0
    %p45 = por %p43, %p44
    %p46 = scmp.ne.s32.totalorder %s35, %s38
    %p47 = scmp.eq.s32.totalorder %s16, 1
    %p48 = por %p46, %p47
    %p49 = scmp.ne.s32.totalorder %s38, %s39
    %p50 = scmp.eq.s32.totalorder %s16, 0
    %p51 = por %p49, %p50
    %p52 = scmp.ne.s32.totalorder %s38, %s39
    %p53 = scmp.eq.s32.totalorder %s17, 1
    %p54 = por %p52, %p53
    %p56 = scmp.ne.s32.totalorder %s39, %s55
    %p57 = scmp.eq.s32.totalorder %s17, 0
    %p58 = por %p56, %p57
    %s59 = ssub.s32 %s18, %s30
    %s60 = ssub.s32 %s19, %s26
    %s61 = sor.u32 %s59, %s60
    %p62 = scmp.eq.s32.totalorder %s61, 0
    %s64 = sadd.s32 %s63, 1
    %s65 = scalar_select %p62, %s63, %s64
    %p68 = pneg %p62
    %p69 = scmp.eq.s32.totalorder %s11, 1
    %p70 = por %p68, %p69
    %p71 = scmp.ne.s32.totalorder %s63, %s66
    %p72 = scmp.eq.s32.totalorder %s11, 0
    %p73 = por %p71, %p72
    %p74 = scmp.ne.s32.totalorder %s63, %s66
    %p75 = scmp.eq.s32.totalorder %s16, 1
    %p76 = por %p74, %p75
    %p77 = scmp.ne.s32.totalorder %s66, %s67
    %p78 = scmp.eq.s32.totalorder %s16, 0
    %p79 = por %p77, %p78
    %p80 = scmp.ne.s32.totalorder %s66, %s67
    %p81 = scmp.eq.s32.totalorder %s17, 1
    %p82 = por %p80, %p81
    %p84 = scmp.ne.s32.totalorder %s67, %s83
    %p85 = scmp.eq.s32.totalorder %s17, 0
    %p86 = por %p84, %p85
    %s87 = ssub.s32 %s18, %s30
    %s88 = ssub.s32 %s19, %s26
    %s89 = sor.u32 %s87, %s88
    %p90 = scmp.eq.s32.totalorder %s89, 0
    %s92 = sadd.s32 %s91, 1
    %s93 = scalar_select %p90, %s91, %s92
    %p96 = pneg %p90
    %p97 = scmp.eq.s32.totalorder %s11, 1
    %p98 = por %p96, %p97
    %p99 = scmp.ne.s32.totalorder %s91, %s94
    %p100 = scmp.eq.s32.totalorder %s11, 0
    %p101 = por %p99, %p100
    %p102 = scmp.ne.s32.totalorder %s91, %s94
    %p103 = scmp.eq.s32.totalorder %s16, 1
    %p104 = por %p102, %p103
    %p105 = scmp.ne.s32.totalorder %s94, %s95
    %p106 = scmp.eq.s32.totalorder %s16, 0
    %p107 = por %p105, %p106
    %p108 = scmp.ne.s32.totalorder %s94, %s95
    %p109 = scmp.eq.s32.totalorder %s17, 1
    %p110 = por %p108, %p109
    %p112 = scmp.ne.s32.totalorder %s95, %s111
    %p113 = scmp.eq.s32.totalorder %s17, 0
    %p114 = por %p112, %p113
    %s115 = ssub.s32 %s18, %s30
    %s116 = ssub.s32 %s19, %s26
    %s117 = sor.u32 %s115, %s116
    %p118 = scmp.eq.s32.totalorder %s117, 0
    %s120 = sadd.s32 %s119, 1
    %s121 = scalar_select %p118, %s119, %s120
    %p124 = pneg %p118
    %p125 = scmp.eq.s32.totalorder %s11, 1
    %p126 = por %p124, %p125
    %p127 = scmp.ne.s32.totalorder %s119, %s122
    %p128 = scmp.eq.s32.totalorder %s11, 0
    %p129 = por %p127, %p128
    %p130 = scmp.ne.s32.totalorder %s119, %s122
    %p131 = scmp.eq.s32.totalorder %s16, 1
    %p132 = por %p130, %p131
    %p133 = scmp.ne.s32.totalorder %s122, %s123
    %p134 = scmp.eq.s32.totalorder %s16, 0
    %p135 = por %p133, %p134
    %p136 = scmp.ne.s32.totalorder %s122, %s123
    %p137 = scmp.eq.s32.totalorder %s17, 1
    %p138 = por %p136, %p137
    %p140 = scmp.ne.s32.totalorder %s123, %s139
    %p141 = scmp.eq.s32.totalorder %s17, 0
    %p142 = por %p140, %p141
    %s143 = ssub.s32 %s18, %s30
    %s144 = ssub.s32 %s19, %s26
    %s145 = sor.u32 %s143, %s144
    %p146 = scmp.eq.s32.totalorder %s145, 0
    %s148 = sadd.s32 %s147, 1
    %s149 = scalar_select %p146, %s147, %s148
    %p152 = pneg %p146
    %p153 = scmp.eq.s32.totalorder %s11, 1
    %p154 = por %p152, %p153
    %p155 = scmp.ne.s32.totalorder %s147, %s150
    %p156 = scmp.eq.s32.totalorder %s11, 0
    %p157 = por %p155, %p156
    %p158 = scmp.ne.s32.totalorder %s147, %s150
    %p159 = scmp.eq.s32.totalorder %s16, 1
    %p160 = por %p158, %p159
    %p161 = scmp.ne.s32.totalorder %s150, %s151
    %p162 = scmp.eq.s32.totalorder %s16, 0
    %p163 = por %p161, %p162
    %p164 = scmp.ne.s32.totalorder %s150, %s151
    %p165 = scmp.eq.s32.totalorder %s17, 1
    %p166 = por %p164, %p165
    %p168 = scmp.ne.s32.totalorder %s151, %s167
    %p169 = scmp.eq.s32.totalorder %s17, 0
    %p170 = por %p168, %p169
    %p171 = scmp.le.s32.totalorder 1, %s11
    %p172 = scmp.lt.s32.totalorder %s11, 3
    %p173 = pnand %p171, %p172
    %p174 = pneg %p173
    // Predicated region
    $region9: #{pseudo_label_loss.2} parent=5 // pred_check
      _
    $region10: #{pseudo_label_loss.2} parent=5 // pred_check_branch
      %176 = sbr.rel (%p173) target = $region12
    $region11: #{pseudo_label_loss.2} parent=5 // pred_region
      %s177 = ssub.s32 %s11, 1
    $region12: #{pseudo_label_loss.2} parent=5 // pred_fallthru
      _
    %p178 = scmp.lt.s32.totalorder %s11, 2
    // Predicated region
    $region13: #{pseudo_label_loss.2} parent=5 // pred_check
      %p179 = pneg %p178
    $region14: #{pseudo_label_loss.2} parent=5 // pred_check_branch
      %181 = sbr.rel (%p179) target = $region16
    $region15: #{pseudo_label_loss.2} parent=5 // pred_region
      // Predicated region
      $region17: #{pseudo_label_loss.2} parent=15 // pred_check
        %p182 = pneg %p45
      $region18: #{pseudo_label_loss.2} parent=15 // pred_check_branch
        %184 = sbr.rel (%p182) target = $region20
      $region19: #{pseudo_label_loss.2} parent=15 // pred_region
        %s185 = smul.u32 2, %s19
        %p186 = scmp.lt.s32.totalorder %s18, 1
        %s187 = scalar_select %p186, %s18, 1
        %p188 = scmp.lt.s32.totalorder %s185, 1
        %s189 = scalar_select %p188, %s185, 1
        %s190 = smul.addr %s187, 2
        %s191 = sadd.s32 %s189, %s190
        %s192 = smul.addr %s191, 4
        %s193 = scalar_lea.vmem %s0, %s192
        %s194 = smul.u32 2, %s19
      $region20: #{pseudo_label_loss.2} parent=15 // pred_fallthru
        _
      // Predicated region
      $region21: #{pseudo_label_loss.2} parent=15 // pred_check
        %p195 = pneg %p73
      $region22: #{pseudo_label_loss.2} parent=15 // pred_check_branch
        %197 = sbr.rel (%p195) target = $region24
      $region23: #{pseudo_label_loss.2} parent=15 // pred_region
        %s198 = smul.u32 2, %s19
        %p199 = scmp.lt.s32.totalorder %s18, 1
        %s200 = scalar_select %p199, %s18, 1
        %p201 = scmp.lt.s32.totalorder %s198, 1
        %s202 = scalar_select %p201, %s198, 1
        %s203 = smul.addr %s200, 2
        %s204 = sadd.s32 %s202, %s203
        %s205 = smul.addr %s204, 4
        %s206 = scalar_lea.vmem %s1, %s205
        %s207 = smul.u32 2, %s19
      $region24: #{pseudo_label_loss.2} parent=15 // pred_fallthru
        _
      // Predicated region
      $region25: #{pseudo_label_loss.2} parent=15 // pred_check
        %p208 = pneg %p101
      $region26: #{pseudo_label_loss.2} parent=15 // pred_check_branch
        %210 = sbr.rel (%p208) target = $region28
      $region27: #{pseudo_label_loss.2} parent=15 // pred_region
        %s211 = smul.u32 2, %s19
        %p212 = scmp.lt.s32.totalorder %s18, 1
        %s213 = scalar_select %p212, %s18, 1
        %p214 = scmp.lt.s32.totalorder %s211, 1
        %s215 = scalar_select %p214, %s211, 1
        %s216 = smul.addr %s213, 2
        %s217 = sadd.s32 %s215, %s216
        %s218 = scalar_lea.vmem %s2, %s217
        %s219 = smul.u32 2, %s19
      $region28: #{pseudo_label_loss.2} parent=15 // pred_fallthru
        _
    $region16: #{pseudo_label_loss.2} parent=5 // pred_fallthru
      _
    %p220 = scmp.le.s32.totalorder 1, %s11
    %p221 = scmp.lt.s32.totalorder %s11, 3
    %p222 = pnand %p220, %p221
    %p223 = pneg %p222
    // Predicated region
    $region29: #{pseudo_label_loss.2} parent=5 // pred_check
      _
    $region30: #{pseudo_label_loss.2} parent=5 // pred_check_branch
      %225 = sbr.rel (%p222) target = $region32
    $region31: #{pseudo_label_loss.2} parent=5 // pred_region
      %s226 = ssub.s32 %s11, 1
      %s227 = smul.u32 2, %s21
      %p228 = scmp.lt.s32.totalorder %s20, 1
      %s229 = scalar_select %p228, %s20, 1
      %p230 = scmp.lt.s32.totalorder %s227, 1
      %s231 = scalar_select %p230, %s227, 1
      %s232 = smul.addr %s229, 2
      %s233 = sadd.s32 %s231, %s232
      %s234 = smul.addr %s233, 4
      %s235 = scalar_lea.vmem %s0, %s234
      %p236 = pneg %p51
      %p237 = pneg %p48
      %s238 = smul.u32 2, %s21
      %p239 = scmp.lt.s32.totalorder %s20, 1
      %s240 = scalar_select %p239, %s20, 1
      %p241 = scmp.lt.s32.totalorder %s238, 1
      %s242 = scalar_select %p241, %s238, 1
      %s243 = smul.addr %s240, 2
      %s244 = sadd.s32 %s242, %s243
      %s245 = smul.addr %s244, 4
      %s246 = scalar_lea.vmem %s1, %s245
      %p247 = pneg %p79
      %p248 = pneg %p76
      %s249 = smul.u32 2, %s21
      %p250 = scmp.lt.s32.totalorder %s20, 1
      %s251 = scalar_select %p250, %s20, 1
      %p252 = scmp.lt.s32.totalorder %s249, 1
      %s253 = scalar_select %p252, %s249, 1
      %s254 = smul.addr %s251, 2
      %s255 = sadd.s32 %s253, %s254
      %s256 = scalar_lea.vmem %s2, %s255
      %p257 = pneg %p107
      %p258 = pneg %p104
      %p259 = pneg %p135
      %p260 = pneg %p132
      %s261 = smul.u32 2, %s21
      %p262 = scmp.lt.s32.totalorder %s20, 1
      %s263 = scalar_select %p262, %s20, 1
      %p264 = scmp.lt.s32.totalorder %s261, 1
      %s265 = scalar_select %p264, %s261, 1
      %s266 = smul.addr %s263, 2
      %s267 = sadd.s32 %s265, %s266
      %s268 = scalar_lea.vmem %s3, %s267
      %p269 = pneg %p163
      %p270 = pneg %p160
      %s271 = smul.u32 2, %s21
      %p272 = scmp.lt.s32.totalorder %s20, 1
      %s273 = scalar_select %p272, %s20, 1
      %p274 = scmp.lt.s32.totalorder %s271, 1
      %s275 = scalar_select %p274, %s271, 1
      %s276 = smul.addr %s273, 2
      %s277 = sadd.s32 %s275, %s276
      %s278 = scalar_lea.vmem %s4, %s277
      %s279 = smul.u32 2, %s21
      %p280 = scmp.lt.s32.totalorder %s20, 1
      %s281 = scalar_select %p280, %s20, 1
      %p282 = scmp.lt.s32.totalorder %s279, 1
      %s283 = scalar_select %p282, %s279, 1
      %s284 = smul.addr %s281, 2
      %s285 = sadd.s32 %s283, %s284
      %s286 = smul.addr %s285, 4
      %s287 = scalar_lea.vmem %s0, %s286
      %s288 = smul.u32 2, %s21
      %s289 = smul.u32 2, %s21
      %p290 = scmp.lt.s32.totalorder %s20, 1
      %s291 = scalar_select %p290, %s20, 1
      %p292 = scmp.lt.s32.totalorder %s289, 1
      %s293 = scalar_select %p292, %s289, 1
      %s294 = smul.addr %s291, 2
      %s295 = sadd.s32 %s293, %s294
      %s296 = smul.addr %s295, 4
      %s297 = scalar_lea.vmem %s1, %s296
      %s298 = smul.u32 2, %s21
      %s299 = smul.u32 2, %s21
      %p300 = scmp.lt.s32.totalorder %s20, 1
      %s301 = scalar_select %p300, %s20, 1
      %p302 = scmp.lt.s32.totalorder %s299, 1
      %s303 = scalar_select %p302, %s299, 1
      %s304 = smul.addr %s301, 2
      %s305 = sadd.s32 %s303, %s304
      %s306 = scalar_lea.vmem %s2, %s305
      %s307 = smul.u32 2, %s21
      %s308 = smul.u32 2, %s21
      %p309 = scmp.lt.s32.totalorder %s20, 1
      %s310 = scalar_select %p309, %s20, 1
      %p311 = scmp.lt.s32.totalorder %s308, 1
      %s312 = scalar_select %p311, %s308, 1
      %s313 = smul.addr %s310, 2
      %s314 = sadd.s32 %s312, %s313
      %s315 = scalar_lea.vmem %s3, %s314
      %s316 = smul.u32 2, %s21
      %s317 = smul.u32 2, %s21
      %p318 = scmp.lt.s32.totalorder %s20, 1
      %s319 = scalar_select %p318, %s20, 1
      %p320 = scmp.lt.s32.totalorder %s317, 1
      %s321 = scalar_select %p320, %s317, 1
      %s322 = smul.addr %s319, 2
      %s323 = sadd.s32 %s321, %s322
      %s324 = scalar_lea.vmem %s4, %s323
      %s325 = smul.u32 2, %s21
      %v326 = vld [vmem:[%s287] sm:$0xff]
      %v327 = vadd.f32 %v326, 1e-06
      %v328 = vlog2.pop %v327
      %v329 = vmul.f32 %v328, 0.6931472
      %v330 = vmul.f32 %v326, %v329
      %v332 = vcombine.high %v330, %v330
      %vm334 = vcmask 1043456
      %v335 = vsel %vm334, %v330, 0.0
      %v336 = vrot.slane %v335, 4
      %v337 = vadd.f32 %v335, %v336
      %v338 = vrot.slane %v337, 2
      %v339 = vadd.f32 %v337, %v338
      %v340 = vrot.slane %v339, 1
      %v341 = vadd.f32 %v339, %v340
      %v342 = vsel %vm334, %v332, 0.0
      %v343 = vrot.slane %v342, 4
      %v344 = vadd.f32 %v342, %v343
      %v345 = vrot.slane %v344, 2
      %v346 = vadd.f32 %v344, %v345
      %v347 = vrot.slane %v346, 1
      %v348 = vadd.f32 %v346, %v347
      %v349 = vsub.f32 0.0, %v341
      %v350 = vsub.f32 0.0, %v348
      %v353 = vcombine.low %v349, %v350
      %v355 = vunpack.c.l.s4 1966171168
      %v356 = vunpack.c.0.s8 %v355
      %v357 = vlaneseq
      %v358 = vshrl.u32 %v357, 7
      %v359 = vsub.s32 %v356, %v358
      %v360 = vrot.slane %v353, %v359
      %v362 = vunpack.c.l.s4 1966171168
      %v363 = vunpack.c.0.s8 %v362
      %v364 = vlaneseq
      %v365 = vshrl.u32 %v364, 7
      %v366 = vsub.s32 %v363, %v365
      %v367 = vrot.slane %v360, %v366
      %v369 = vlaneseq
      %vm370 = vcmp.ge.s32.totalorder %v369, 0
      %vm371 = vcmp.lt.s32.totalorder %v369, 256
      %vm372 = vmand %vm370, %vm371
      %373 = vst.msk [vmem:[%s315] sm:$0x3] %vm372, %v367
      %v374 = vld [vmem:[%s297] sm:$0xff]
      %v376 = vcombine.high %v374, %v374
      %v378 = vsel %vm334, %v374, -inf
      %v379 = vrot.slane %v378, 4
      %v380 = vmax.f32 %v378, %v379
      %v381 = vrot.slane %v380, 2
      %v382 = vmax.f32 %v380, %v381
      %v383 = vrot.slane %v382, 1
      %v384 = vmax.f32 %v382, %v383
      %v385 = vsel %vm334, %v376, -inf
      %v386 = vrot.slane %v385, 4
      %v387 = vmax.f32 %v385, %v386
      %v388 = vrot.slane %v387, 2
      %v389 = vmax.f32 %v387, %v388
      %v390 = vrot.slane %v389, 1
      %v391 = vmax.f32 %v389, %v390
      %v394 = vcombine.low %v384, %v391
      %v396 = vsub.f32 %v374, %v394
      %v397 = vmul.f32 %v396, 1.442695
      %v398 = vpow.pop %v397
      %v400 = vcombine.high %v398, %v398
      %v402 = vsel %vm334, %v398, 0.0
      %v403 = vrot.slane %v402, 4
      %v404 = vadd.f32 %v402, %v403
      %v405 = vrot.slane %v404, 2
      %v406 = vadd.f32 %v404, %v405
      %v407 = vrot.slane %v406, 1
      %v408 = vadd.f32 %v406, %v407
      %v409 = vsel %vm334, %v400, 0.0
      %v410 = vrot.slane %v409, 4
      %v411 = vadd.f32 %v409, %v410
      %v412 = vrot.slane %v411, 2
      %v413 = vadd.f32 %v411, %v412
      %v414 = vrot.slane %v413, 1
      %v415 = vadd.f32 %v413, %v414
      %v416 = vlog2.pop %v408
      %v417 = vmul.f32 %v416, 0.6931472
      %v418 = vlog2.pop %v415
      %v419 = vmul.f32 %v418, 0.6931472
      %v420 = vadd.f32 %v417, %v384
      %v421 = vadd.f32 %v419, %v391
      %v422 = vlaneseq
      %v423 = vshrl.u32 %v422, 7
      %v424 = vld [vmem:[%s306] sm:$0x3]
      %v425 = vlaneseq
      %v426 = vshrl.u32 %v425, 7
      %v427 = vsub.s32 0, %v426
      %v428 = vrot.slane %v424, %v427
      %v429 = vlaneseq
      %v430 = vshrl.u32 %v429, 7
      %v431 = vsub.s32 1, %v430
      %v432 = vrot.slane %v424, %v431
      %vm433 = vcmp.eq.s32.totalorder %v423, %v428
      %vm434 = vcmp.eq.s32.totalorder %v423, %v432
      %v435 = vsel %vm433, %v374, 0.0
      %v436 = vsel %vm434, %v376, 0.0
      %v437 = vsel %vm334, %v435, 0.0
      %v438 = vrot.slane %v437, 4
      %v439 = vadd.f32 %v437, %v438
      %v440 = vrot.slane %v439, 2
      %v441 = vadd.f32 %v439, %v440
      %v442 = vrot.slane %v441, 1
      %v443 = vadd.f32 %v441, %v442
      %v444 = vsel %vm334, %v436, 0.0
      %v445 = vrot.slane %v444, 4
      %v446 = vadd.f32 %v444, %v445
      %v447 = vrot.slane %v446, 2
      %v448 = vadd.f32 %v446, %v447
      %v449 = vrot.slane %v448, 1
      %v450 = vadd.f32 %v448, %v449
      %v451 = vsub.f32 %v420, %v443
      %v452 = vsub.f32 %v421, %v450
      %v455 = vcombine.low %v451, %v452
      %v457 = vunpack.c.l.s4 1966171168
      %v458 = vunpack.c.0.s8 %v457
      %v459 = vlaneseq
      %v460 = vshrl.u32 %v459, 7
      %v461 = vsub.s32 %v458, %v460
      %v462 = vrot.slane %v455, %v461
      %v464 = vunpack.c.l.s4 1966171168
      %v465 = vunpack.c.0.s8 %v464
      %v466 = vlaneseq
      %v467 = vshrl.u32 %v466, 7
      %v468 = vsub.s32 %v465, %v467
      %v469 = vrot.slane %v462, %v468
      %471 = vst.msk [vmem:[%s324] sm:$0x3] %vm372, %v469
      %s472 = smul.u32 2, %s21
      %p473 = scmp.lt.s32.totalorder %s20, 1
      %s474 = scalar_select %p473, %s20, 1
      %p475 = scmp.lt.s32.totalorder %s472, 1
      %s476 = scalar_select %p475, %s472, 1
      %s477 = smul.addr %s474, 2
      %s478 = sadd.s32 %s476, %s477
      %s479 = scalar_lea.vmem %s3, %s478
      %s480 = smul.u32 2, %s21
      %p481 = scmp.lt.s32.totalorder %s20, 1
      %s482 = scalar_select %p481, %s20, 1
      %p483 = scmp.lt.s32.totalorder %s480, 1
      %s484 = scalar_select %p483, %s480, 1
      %s485 = smul.addr %s482, 2
      %s486 = sadd.s32 %s484, %s485
      %s487 = scalar_lea.vmem %s4, %s486
      // Predicated region
      $region33: #{pseudo_label_loss.2} parent=31 // pred_check
        %p488 = pneg %p132
      $region34: #{pseudo_label_loss.2} parent=31 // pred_check_branch
        %490 = sbr.rel (%p488) target = $region36
      $region35: #{pseudo_label_loss.2} parent=31 // pred_region
        %s491 = smul.u32 2, %s21
      $region36: #{pseudo_label_loss.2} parent=31 // pred_fallthru
        _
      // Predicated region
      $region37: #{pseudo_label_loss.2} parent=31 // pred_check
        %p492 = pneg %p160
      $region38: #{pseudo_label_loss.2} parent=31 // pred_check_branch
        %494 = sbr.rel (%p492) target = $region40
      $region39: #{pseudo_label_loss.2} parent=31 // pred_region
        %s495 = smul.u32 2, %s21
      $region40: #{pseudo_label_loss.2} parent=31 // pred_fallthru
        _
    $region32: #{pseudo_label_loss.2} parent=5 // pred_fallthru
      _
    %p496 = scmp.le.s32.totalorder 2, %s11
    // Predicated region
    $region41: #{pseudo_label_loss.2} parent=5 // pred_check
      %p497 = pneg %p496
    $region42: #{pseudo_label_loss.2} parent=5 // pred_check_branch
      %499 = sbr.rel (%p497) target = $region44
    $region43: #{pseudo_label_loss.2} parent=5 // pred_region
      %s500 = ssub.s32 %s11, 2
      // Predicated region
      $region45: #{pseudo_label_loss.2} parent=43 // pred_check
        %p501 = pneg %p138
      $region46: #{pseudo_label_loss.2} parent=43 // pred_check_branch
        %503 = sbr.rel (%p501) target = $region48
      $region47: #{pseudo_label_loss.2} parent=43 // pred_region
        %s504 = smul.u32 2, %s23
        %p505 = scmp.lt.s32.totalorder %s22, 1
        %s506 = scalar_select %p505, %s22, 1
        %p507 = scmp.lt.s32.totalorder %s504, 1
        %s508 = scalar_select %p507, %s504, 1
        %s509 = smul.addr %s506, 2
        %s510 = sadd.s32 %s508, %s509
        %s511 = scalar_lea.vmem %s3, %s510
      $region48: #{pseudo_label_loss.2} parent=43 // pred_fallthru
        _
      // Predicated region
      $region49: #{pseudo_label_loss.2} parent=43 // pred_check
        %p512 = pneg %p166
      $region50: #{pseudo_label_loss.2} parent=43 // pred_check_branch
        %514 = sbr.rel (%p512) target = $region52
      $region51: #{pseudo_label_loss.2} parent=43 // pred_region
        %s515 = smul.u32 2, %s23
        %p516 = scmp.lt.s32.totalorder %s22, 1
        %s517 = scalar_select %p516, %s22, 1
        %p518 = scmp.lt.s32.totalorder %s515, 1
        %s519 = scalar_select %p518, %s515, 1
        %s520 = smul.addr %s517, 2
        %s521 = sadd.s32 %s519, %s520
        %s522 = scalar_lea.vmem %s4, %s521
      $region52: #{pseudo_label_loss.2} parent=43 // pred_fallthru
        _
    $region44: #{pseudo_label_loss.2} parent=5 // pred_fallthru
      _
  $region6: #{pseudo_label_loss.2} parent=0 // loop_footer
    %s15 = sadd.s32 1, %s11
  $region7: #{pseudo_label_loss.2} parent=0 // loop_footer_branch
    %10 = sbr.rel target = $region3
  $region8: #{pseudo_label_loss.2} parent=0 // loop_exit
    _

// kernel: pseudo_label_loss.3
$region0: #{pseudo_label_loss.3}
  #allocation0 [shape = 'u32[]', space=smem, size = 0x4, offset = 0x4, fixed_abs, tag = 'smem constant byte address 0x4 - core index']
  #allocation1 [shape = 'u32[144,128]{1,0:T(1,128)}', space=vmem, size = 0x12000, scoped, tag = 'internal scratch']
  #allocation2 [shape = 'f32[1,1,256]{2,1,0:T(1,128)}', space=vmem, size = 0x400, scoped, tag = 'scratch operand']
  #allocation3 [shape = 'f32[1,1,256]{2,1,0:T(1,128)}', space=vmem, size = 0x400, scoped, tag = 'scratch operand']
  %s0 = inlined_call_operand.vmem [shape: f32[4], index: 0, kind: input, shape index: {}]
  %s1 = inlined_call_operand.vmem [shape: f32[2,1,256], index: 1, kind: input, shape index: {}]
  %s2 = inlined_call_operand.vmem [shape: f32[2,1,256], index: 2, kind: input, shape index: {}]
  %s3 = inlined_call_operand.vmem [shape: s32[2,1,256], index: 3, kind: input, shape index: {}]
  %s4 = inlined_call_operand.vmem [shape: f32[2,1,1], index: 4, kind: output, shape index: {0}]
  %s5 = inlined_call_operand.vmem [shape: f32[2,1,1], index: 5, kind: output, shape index: {1}]
  %6 = xla_tuple %s4, %s5
  %s7 = sld [smem:[#allocation0]]
  $region69: #{pseudo_label_loss.3} parent=0
    _
  %s9 = ssub.s32 1, %s7
  %s10 = scalar_select 0, %s9, %s7
  $region1: #{pseudo_label_loss.3} parent=0
    #allocation4 [shape = 'u8[512]{0}', space=smem, size = 0x200, scoped, tag = 'input window, operand 0, single buffered']
    #allocation5 [shape = 's32[2]{0}', space=sflag, size = 0x8, scoped, tag = 'scoped memory for pseudo_label_loss.3']
    %11 = vsyncpa [#allocation5], 0
    loop: start=0, step=1, limit=4
    $region2: #{pseudo_label_loss.3} parent=1 // loop_pre_header
      _
    $region3: #{pseudo_label_loss.3} parent=1 // loop_header
      %s13 = sphi 0, %s17
      %p14 = scmp.ge.s32.totalorder %s13, 4
      %s20 = sphi 0, %s32
      %s21 = sphi 0, %s28
      %s22 = sphi 0, %s20
      %s23 = sphi 0, %s21
      %s24 = sphi 0, %s22
      %s25 = sphi 0, %s23
      %s33 = sphi 0, %s33
      %s35 = sphi 0, %s33
      %s36 = sphi 0, %s35
      %s50 = sphi 0, %s36
      %s58 = sphi 0, %s60
      %s61 = sphi 0, %s58
      %s62 = sphi 0, %s61
      %s78 = sphi 0, %s62
      %s86 = sphi 0, %s88
      %s89 = sphi 0, %s86
      %s90 = sphi 0, %s89
      %s106 = sphi 0, %s90
      %s114 = sphi 0, %s116
      %s117 = sphi 0, %s114
      %s118 = sphi 0, %s117
      %s134 = sphi 0, %s118
      %s140 = sphi 0, %s142
      %s143 = sphi 0, %s140
      %s144 = sphi 0, %s143
      %s160 = sphi 0, %s144
      %s166 = sphi 0, %s168
      %s169 = sphi 0, %s166
      %s170 = sphi 0, %s169
      %s186 = sphi 0, %s170
    $region4: #{pseudo_label_loss.3} parent=1 // loop_header_branch
      %16 = sbr.rel (%p14) target = $region8
    $region5: #{pseudo_label_loss.3} parent=1 // loop_body
      %s18 = ssub.s32 %s13, 1
      %s19 = ssub.s32 %s13, 2
      %s26 = sadd.s32 1, %s21
      %p27 = scmp.ge.s32.totalorder %s26, 1
      %s28 = scalar_select %p27, 0, %s26
      %s29 = sadd.s32 1, %s20
      %s30 = scalar_select %p27, %s29, %s20
      %p31 = scmp.ge.s32.totalorder %s30, 2
      %s32 = scalar_select %p31, 0, %s30
      %s34 = sadd.s32 %s33, 1
      %p37 = scmp.eq.s32.totalorder %s13, 1
      %p38 = scmp.ne.s32.totalorder %s33, %s35
      %p39 = scmp.eq.s32.totalorder %s13, 0
      %p40 = por %p38, %p39
      %p41 = scmp.ne.s32.totalorder %s33, %s35
      %p42 = scmp.eq.s32.totalorder %s18, 1
      %p43 = por %p41, %p42
      %p44 = scmp.ne.s32.totalorder %s35, %s36
      %p45 = scmp.eq.s32.totalorder %s18, 0
      %p46 = por %p44, %p45
      %p47 = scmp.ne.s32.totalorder %s35, %s36
      %p48 = scmp.eq.s32.totalorder %s19, 1
      %p49 = por %p47, %p48
      %p51 = scmp.ne.s32.totalorder %s36, %s50
      %p52 = scmp.eq.s32.totalorder %s19, 0
      %p53 = por %p51, %p52
      %s54 = ssub.s32 %s20, %s32
      %s55 = ssub.s32 %s21, %s28
      %s56 = sor.u32 %s54, %s55
      %p57 = scmp.eq.s32.totalorder %s56, 0
      %s59 = sadd.s32 %s58, 1
      %s60 = scalar_select %p57, %s58, %s59
      %p63 = pneg %p57
      %p64 = scmp.eq.s32.totalorder %s13, 1
      %p65 = por %p63, %p64
      %p66 = scmp.ne.s32.totalorder %s58, %s61
      %p67 = scmp.eq.s32.totalorder %s13, 0
      %p68 = por %p66, %p67
      %p69 = scmp.ne.s32.totalorder %s58, %s61
      %p70 = scmp.eq.s32.totalorder %s18, 1
      %p71 = por %p69, %p70
      %p72 = scmp.ne.s32.totalorder %s61, %s62
      %p73 = scmp.eq.s32.totalorder %s18, 0
      %p74 = por %p72, %p73
      %p75 = scmp.ne.s32.totalorder %s61, %s62
      %p76 = scmp.eq.s32.totalorder %s19, 1
      %p77 = por %p75, %p76
      %p79 = scmp.ne.s32.totalorder %s62, %s78
      %p80 = scmp.eq.s32.totalorder %s19, 0
      %p81 = por %p79, %p80
      %s82 = ssub.s32 %s20, %s32
      %s83 = ssub.s32 %s21, %s28
      %s84 = sor.u32 %s82, %s83
      %p85 = scmp.eq.s32.totalorder %s84, 0
      %s87 = sadd.s32 %s86, 1
      %s88 = scalar_select %p85, %s86, %s87
      %p91 = pneg %p85
      %p92 = scmp.eq.s32.totalorder %s13, 1
      %p93 = por %p91, %p92
      %p94 = scmp.ne.s32.totalorder %s86, %s89
      %p95 = scmp.eq.s32.totalorder %s13, 0
      %p96 = por %p94, %p95
      %p97 = scmp.ne.s32.totalorder %s86, %s89
      %p98 = scmp.eq.s32.totalorder %s18, 1
      %p99 = por %p97, %p98
      %p100 = scmp.ne.s32.totalorder %s89, %s90
      %p101 = scmp.eq.s32.totalorder %s18, 0
      %p102 = por %p100, %p101
      %p103 = scmp.ne.s32.totalorder %s89, %s90
      %p104 = scmp.eq.s32.totalorder %s19, 1
      %p105 = por %p103, %p104
      %p107 = scmp.ne.s32.totalorder %s90, %s106
      %p108 = scmp.eq.s32.totalorder %s19, 0
      %p109 = por %p107, %p108
      %s110 = ssub.s32 %s20, %s32
      %s111 = ssub.s32 %s21, %s28
      %s112 = sor.u32 %s110, %s111
      %p113 = scmp.eq.s32.totalorder %s112, 0
      %s115 = sadd.s32 %s114, 1
      %s116 = scalar_select %p113, %s114, %s115
      %p119 = pneg %p113
      %p120 = scmp.eq.s32.totalorder %s13, 1
      %p121 = por %p119, %p120
      %p122 = scmp.ne.s32.totalorder %s114, %s117
      %p123 = scmp.eq.s32.totalorder %s13, 0
      %p124 = por %p122, %p123
      %p125 = scmp.ne.s32.totalorder %s114, %s117
      %p126 = scmp.eq.s32.totalorder %s18, 1
      %p127 = por %p125, %p126
      %p128 = scmp.ne.s32.totalorder %s117, %s118
      %p129 = scmp.eq.s32.totalorder %s18, 0
      %p130 = por %p128, %p129
      %p131 = scmp.ne.s32.totalorder %s117, %s118
      %p132 = scmp.eq.s32.totalorder %s19, 1
      %p133 = por %p131, %p132
      %p135 = scmp.ne.s32.totalorder %s118, %s134
      %p136 = scmp.eq.s32.totalorder %s19, 0
      %p137 = por %p135, %p136
      %s138 = ssub.s32 %s20, %s32
      %p139 = scmp.eq.s32.totalorder %s138, 0
      %s141 = sadd.s32 %s140, 1
      %s142 = scalar_select %p139, %s140, %s141
      %p145 = pneg %p139
      %p146 = scmp.eq.s32.totalorder %s13, 1
      %p147 = por %p145, %p146
      %p148 = scmp.ne.s32.totalorder %s140, %s143
      %p149 = scmp.eq.s32.totalorder %s13, 0
      %p150 = por %p148, %p149
      %p151 = scmp.ne.s32.totalorder %s140, %s143
      %p152 = scmp.eq.s32.totalorder %s18, 1
      %p153 = por %p151, %p152
      %p154 = scmp.ne.s32.totalorder %s143, %s144
      %p155 = scmp.eq.s32.totalorder %s18, 0
      %p156 = por %p154, %p155
      %p157 = scmp.ne.s32.totalorder %s143, %s144
      %p158 = scmp.eq.s32.totalorder %s19, 1
      %p159 = por %p157, %p158
      %p161 = scmp.ne.s32.totalorder %s144, %s160
      %p162 = scmp.eq.s32.totalorder %s19, 0
      %p163 = por %p161, %p162
      %s164 = ssub.s32 %s20, %s32
      %p165 = scmp.eq.s32.totalorder %s164, 0
      %s167 = sadd.s32 %s166, 1
      %s168 = scalar_select %p165, %s166, %s167
      %p171 = pneg %p165
      %p172 = scmp.eq.s32.totalorder %s13, 1
      %p173 = por %p171, %p172
      %p174 = scmp.ne.s32.totalorder %s166, %s169
      %p175 = scmp.eq.s32.totalorder %s13, 0
      %p176 = por %p174, %p175
      %p177 = scmp.ne.s32.totalorder %s166, %s169
      %p178 = scmp.eq.s32.totalorder %s18, 1
      %p179 = por %p177, %p178
      %p180 = scmp.ne.s32.totalorder %s169, %s170
      %p181 = scmp.eq.s32.totalorder %s18, 0
      %p182 = por %p180, %p181
      %p183 = scmp.ne.s32.totalorder %s169, %s170
      %p184 = scmp.eq.s32.totalorder %s19, 1
      %p185 = por %p183, %p184
      %p187 = scmp.ne.s32.totalorder %s170, %s186
      %p188 = scmp.eq.s32.totalorder %s19, 0
      %p189 = por %p187, %p188
      %p190 = scmp.le.s32.totalorder 1, %s13
      %p191 = scmp.lt.s32.totalorder %s13, 3
      %p192 = pnand %p190, %p191
      %p193 = pneg %p192
      // Predicated region
      $region9: #{pseudo_label_loss.3} parent=5 // pred_check
        _
      $region10: #{pseudo_label_loss.3} parent=5 // pred_check_branch
        %195 = sbr.rel (%p192) target = $region12
      $region11: #{pseudo_label_loss.3} parent=5 // pred_region
        %s196 = ssub.s32 %s13, 1
        // Predicated region
        $region13: #{pseudo_label_loss.3} parent=11 // pred_check
          %p197 = pneg %p46
        $region14: #{pseudo_label_loss.3} parent=11 // pred_check_branch
          %199 = sbr.rel (%p197) target = $region16
        $region15: #{pseudo_label_loss.3} parent=11 // pred_region
          %s201 = ssub.s32 16, 16
          %202 = vsyncadd [#allocation5], %s201
          %s204 = sshll.u32 %s0, 4
          %s205 = int_to_ptr.vmem [resolvable:$true] %s204
          %207 = dma.vmem_to_smem %s205, 16, [#allocation4], [#allocation5]
        $region16: #{pseudo_label_loss.3} parent=11 // pred_fallthru
          _
      $region12: #{pseudo_label_loss.3} parent=5 // pred_fallthru
        _
      %p208 = scmp.lt.s32.totalorder %s13, 2
      // Predicated region
      $region17: #{pseudo_label_loss.3} parent=5 // pred_check
        %p209 = pneg %p208
      $region18: #{pseudo_label_loss.3} parent=5 // pred_check_branch
        %211 = sbr.rel (%p209) target = $region20
      $region19: #{pseudo_label_loss.3} parent=5 // pred_region
        // Predicated region
        $region21: #{pseudo_label_loss.3} parent=19 // pred_check
          %p212 = pneg %p68
        $region22: #{pseudo_label_loss.3} parent=19 // pred_check_branch
          %214 = sbr.rel (%p212) target = $region24
        $region23: #{pseudo_label_loss.3} parent=19 // pred_region
          %s215 = smul.u32 2, %s21
          %p216 = scmp.lt.s32.totalorder %s20, 1
          %s217 = scalar_select %p216, %s20, 1
          %p218 = scmp.lt.s32.totalorder %s215, 1
          %s219 = scalar_select %p218, %s215, 1
          %s220 = smul.addr %s217, 2
          %s221 = sadd.s32 %s219, %s220
          %s222 = scalar_lea.vmem %s1, %s221
          %s223 = smul.u32 2, %s21
        $region24: #{pseudo_label_loss.3} parent=19 // pred_fallthru
          _
        // Predicated region
        $region25: #{pseudo_label_loss.3} parent=19 // pred_check
          %p224 = pneg %p96
        $region26: #{pseudo_label_loss.3} parent=19 // pred_check_branch
          %226 = sbr.rel (%p224) target = $region28
        $region27: #{pseudo_label_loss.3} parent=19 // pred_region
          %s227 = smul.u32 2, %s21
          %p228 = scmp.lt.s32.totalorder %s20, 1
          %s229 = scalar_select %p228, %s20, 1
          %p230 = scmp.lt.s32.totalorder %s227, 1
          %s231 = scalar_select %p230, %s227, 1
          %s232 = smul.addr %s229, 2
          %s233 = sadd.s32 %s231, %s232
          %s234 = scalar_lea.vmem %s2, %s233
          %s235 = smul.u32 2, %s21
        $region28: #{pseudo_label_loss.3} parent=19 // pred_fallthru
          _
        // Predicated region
        $region29: #{pseudo_label_loss.3} parent=19 // pred_check
          %p236 = pneg %p124
        $region30: #{pseudo_label_loss.3} parent=19 // pred_check_branch
          %238 = sbr.rel (%p236) target = $region32
        $region31: #{pseudo_label_loss.3} parent=19 // pred_region
          %s239 = smul.u32 2, %s21
          %p240 = scmp.lt.s32.totalorder %s20, 1
          %s241 = scalar_select %p240, %s20, 1
          %p242 = scmp.lt.s32.totalorder %s239, 1
          %s243 = scalar_select %p242, %s239, 1
          %s244 = smul.addr %s241, 2
          %s245 = sadd.s32 %s243, %s244
          %s246 = scalar_lea.vmem %s3, %s245
          %s247 = smul.u32 2, %s21
        $region32: #{pseudo_label_loss.3} parent=19 // pred_fallthru
          _
      $region20: #{pseudo_label_loss.3} parent=5 // pred_fallthru
        _
      %p248 = scmp.le.s32.totalorder 1, %s13
      %p249 = scmp.lt.s32.totalorder %s13, 3
      %p250 = pnand %p248, %p249
      %p251 = pneg %p250
      // Predicated region
      $region33: #{pseudo_label_loss.3} parent=5 // pred_check
        _
      $region34: #{pseudo_label_loss.3} parent=5 // pred_check_branch
        %253 = sbr.rel (%p250) target = $region36
      $region35: #{pseudo_label_loss.3} parent=5 // pred_region
        %s254 = ssub.s32 %s13, 1
        // Predicated region
        $region37: #{pseudo_label_loss.3} parent=35 // pred_check
          %p255 = pneg %p46
        $region38: #{pseudo_label_loss.3} parent=35 // pred_check_branch
          %257 = sbr.rel (%p255) target = $region40
        $region39: #{pseudo_label_loss.3} parent=35 // pred_region
          %258 = dma.done [#allocation5], 16
        $region40: #{pseudo_label_loss.3} parent=35 // pred_fallthru
          _
        %259 = sfence
        %p260 = pneg %p46
        %p261 = pneg %p43
        %s262 = smul.u32 2, %s23
        %p263 = scmp.lt.s32.totalorder %s22, 1
        %s264 = scalar_select %p263, %s22, 1
        %p265 = scmp.lt.s32.totalorder %s262, 1
        %s266 = scalar_select %p265, %s262, 1
        %s267 = smul.addr %s264, 2
        %s268 = sadd.s32 %s266, %s267
        %s269 = scalar_lea.vmem %s1, %s268
        %p270 = pneg %p74
        %p271 = pneg %p71
        %s272 = smul.u32 2, %s23
        %p273 = scmp.lt.s32.totalorder %s22, 1
        %s274 = scalar_select %p273, %s22, 1
        %p275 = scmp.lt.s32.totalorder %s272, 1
        %s276 = scalar_select %p275, %s272, 1
        %s277 = smul.addr %s274, 2
        %s278 = sadd.s32 %s276, %s277
        %s279 = scalar_lea.vmem %s2, %s278
        %p280 = pneg %p102
        %p281 = pneg %p99
        %s282 = smul.u32 2, %s23
        %p283 = scmp.lt.s32.totalorder %s22, 1
        %s284 = scalar_select %p283, %s22, 1
        %p285 = scmp.lt.s32.totalorder %s282, 1
        %s286 = scalar_select %p285, %s282, 1
        %s287 = smul.addr %s284, 2
        %s288 = sadd.s32 %s286, %s287
        %s289 = scalar_lea.vmem %s3, %s288
        %p290 = pneg %p130
        %p291 = pneg %p127
        %p292 = pneg %p156
        %p293 = pneg %p153
        %p294 = scmp.lt.s32.totalorder %s22, 1
        %s295 = scalar_select %p294, %s22, 1
        %s296 = scalar_lea.vmem %s4, %s295
        %p297 = pneg %p182
        %p298 = pneg %p179
        %p299 = scmp.lt.s32.totalorder %s22, 1
        %s300 = scalar_select %p299, %s22, 1
        %s301 = scalar_lea.vmem %s5, %s300
        %s302 = smul.u32 2, %s23
        %p303 = scmp.lt.s32.totalorder %s22, 1
        %s304 = scalar_select %p303, %s22, 1
        %p305 = scmp.lt.s32.totalorder %s302, 1
        %s306 = scalar_select %p305, %s302, 1
        %s307 = smul.addr %s304, 2
        %s308 = sadd.s32 %s306, %s307
        %s309 = scalar_lea.vmem %s1, %s308
        %s310 = smul.u32 2, %s23
        %s311 = smul.u32 2, %s23
        %p312 = scmp.lt.s32.totalorder %s22, 1
        %s313 = scalar_select %p312, %s22, 1
        %p314 = scmp.lt.s32.totalorder %s311, 1
        %s315 = scalar_select %p314, %s311, 1
        %s316 = smul.addr %s313, 2
        %s317 = sadd.s32 %s315, %s316
        %s318 = scalar_lea.vmem %s2, %s317
        %s319 = smul.u32 2, %s23
        %s320 = smul.u32 2, %s23
        %p321 = scmp.lt.s32.totalorder %s22, 1
        %s322 = scalar_select %p321, %s22, 1
        %p323 = scmp.lt.s32.totalorder %s320, 1
        %s324 = scalar_select %p323, %s320, 1
        %s325 = smul.addr %s322, 2
        %s326 = sadd.s32 %s324, %s325
        %s327 = scalar_lea.vmem %s3, %s326
        %s328 = smul.u32 2, %s23
        %p329 = scmp.lt.s32.totalorder %s22, 1
        %s330 = scalar_select %p329, %s22, 1
        %s331 = scalar_lea.vmem %s4, %s330
        %p332 = scmp.lt.s32.totalorder %s22, 1
        %s333 = scalar_select %p332, %s22, 1
        %s334 = scalar_lea.vmem %s5, %s333
        %p335 = scmp.eq.s32.totalorder %s23, 0
        // Predicated region
        $region41: #{pseudo_label_loss.3} parent=35 // pred_check
          %p336 = pneg %p335
        $region42: #{pseudo_label_loss.3} parent=35 // pred_check_branch
          %338 = sbr.rel (%p336) target = $region44
        $region43: #{pseudo_label_loss.3} parent=35 // pred_region
          %v339 = vlaneseq
          %vm340 = vcmp.ge.s32.totalorder %v339, 0
          %vm341 = vcmp.lt.s32.totalorder %v339, 256
          %vm342 = vmand %vm340, %vm341
          %343 = vst.msk [vmem:[#allocation2] sm:$0x3] %vm342, 0.0
          %344 = vst.msk [vmem:[#allocation3] sm:$0x3] %vm342, 0.0
        $region44: #{pseudo_label_loss.3} parent=35 // pred_fallthru
          _
        %v345 = vld [vmem:[%s327] sm:$0x3]
        %v346 = vld [vmem:[%s309] sm:$0x3]
        %vm347 = vcmp.eq.s32.totalorder %v345, 0
        %s348 = sld [smem:[#allocation4]]
        %v349 = vstv %s348
        %v350 = vsel %vm347, %v349, inf
        %vm351 = vcmp.eq.s32.totalorder %v345, 1
        %s352 = sld [smem:[#allocation4 + $0x1]]
        %v353 = vstv %s352
        %v354 = vsel %vm351, %v353, %v350
        %vm355 = vcmp.eq.s32.totalorder %v345, 2
        %s356 = sld [smem:[#allocation4 + $0x2]]
        %v357 = vstv %s356
        %v358 = vsel %vm355, %v357, %v354
        %vm359 = vcmp.eq.s32.totalorder %v345, 3
        %s360 = sld [smem:[#allocation4 + $0x3]]
        %v361 = vstv %s360
        %v362 = vsel %vm359, %v361, %v358
        %vm363 = vcmp.ge.f32.partialorder %v346, %v362
        %vm364 = vcmp.ne.s32.totalorder %v345, 255
        %vm365 = vmxor %vm363, 1
        %vm366 = vmand %vm364, %vm365
        %v367 = vld [vmem:[#allocation2] sm:$0x3]
        %v368 = vld [vmem:[%s318] sm:$0x3]
        %v369 = vsel %vm366, %v368, 0.0
        %v370 = vadd.f32 %v367, %v369
        %v371 = vlaneseq
        %vm372 = vcmp.ge.s32.totalorder %v371, 0
        %vm373 = vcmp.lt.s32.totalorder %v371, 256
        %vm374 = vmand %vm372, %vm373
        %375 = vst.msk [vmem:[#allocation2] sm:$0x3] %vm374, %v370
        %v376 = vld [vmem:[#allocation3] sm:$0x3]
        %v377 = vsel %vm366, 1, 0
        %v378 = vcvt.s32.f32 %v377
        %v379 = vadd.f32 %v376, %v378
        %380 = vst.msk [vmem:[#allocation3] sm:$0x3] %vm374, %v379
        // Predicated region
        $region45: #{pseudo_label_loss.3} parent=35 // pred_check
          %p381 = pneg %p335
        $region46: #{pseudo_label_loss.3} parent=35 // pred_check_branch
          %383 = sbr.rel (%p381) target = $region48
        $region47: #{pseudo_label_loss.3} parent=35 // pred_region
          %v384 = vld [vmem:[#allocation2] sm:$0x3]
          %v386 = vlaneseq
          %v387 = vshrl.u32 %v386, 7
          %v388 = vsub.s32 0, %v387
          %v389 = vrot.slane %v384, %v388
          %v390 = vlaneseq
          %v391 = vshrl.u32 %v390, 7
          %v392 = vsub.s32 1, %v391
          %v393 = vrot.slane %v384, %v392
          %vm396 = vcmask 1040384
          %v397 = vsel %vm396, %v389, 0.0
          %v398 = vsel %vm396, %v393, 0.0
          %v399 = vadd.f32 %v397, %v398
          %400 = vadd.xlane.f32.xlu0 %v399
          %v401 = vpop.xlane.xlu0 %400
          %v402 = vrot.slane %v401, 4
          %v403 = vadd.f32 %v401, %v402
          %v404 = vrot.slane %v403, 2
          %v405 = vadd.f32 %v403, %v404
          %v406 = vrot.slane %v405, 1
          %v407 = vadd.f32 %v405, %v406
          %s408 = vtos %v407
          %v409 = vstv %s408
          %vm410 = vcmask 0
          %411 = vst.msk [vmem:[%s331] sm:$0x1] %vm410, %v409
          %v412 = vld [vmem:[#allocation3] sm:$0x3]
          %v414 = vlaneseq
          %v415 = vshrl.u32 %v414, 7
          %v416 = vsub.s32 0, %v415
          %v417 = vrot.slane %v412, %v416
          %v418 = vlaneseq
          %v419 = vshrl.u32 %v418, 7
          %v420 = vsub.s32 1, %v419
          %v421 = vrot.slane %v412, %v420
          %v424 = vsel %vm396, %v417, 0.0
          %v425 = vsel %vm396, %v421, 0.0
          %v426 = vadd.f32 %v424, %v425
          %427 = vadd.xlane.f32.xlu0 %v426
          %v428 = vpop.xlane.xlu0 %427
          %v429 = vrot.slane %v428, 4
          %v430 = vadd.f32 %v428, %v429
          %v431 = vrot.slane %v430, 2
          %v432 = vadd.f32 %v430, %v431
          %v433 = vrot.slane %v432, 1
          %v434 = vadd.f32 %v432, %v433
          %s435 = vtos %v434
          %v436 = vstv %s435
          %437 = vst.msk [vmem:[%s334] sm:$0x1] %vm410, %v436
        $region48: #{pseudo_label_loss.3} parent=35 // pred_fallthru
          _
        %p438 = scmp.lt.s32.totalorder %s22, 1
        %s439 = scalar_select %p438, %s22, 1
        %s440 = scalar_lea.vmem %s4, %s439
        %p441 = scmp.lt.s32.totalorder %s22, 1
        %s442 = scalar_select %p441, %s22, 1
        %s443 = scalar_lea.vmem %s5, %s442
        // Predicated region
        $region49: #{pseudo_label_loss.3} parent=35 // pred_check
          %p444 = pneg %p153
        $region50: #{pseudo_label_loss.3} parent=35 // pred_check_branch
          %446 = sbr.rel (%p444) target = $region52
        $region51: #{pseudo_label_loss.3} parent=35 // pred_region
          _
        $region52: #{pseudo_label_loss.3} parent=35 // pred_fallthru
          _
        // Predicated region
        $region53: #{pseudo_label_loss.3} parent=35 // pred_check
          %p447 = pneg %p179
        $region54: #{pseudo_label_loss.3} parent=35 // pred_check_branch
          %449 = sbr.rel (%p447) target = $region56
        $region55: #{pseudo_label_loss.3} parent=35 // pred_region
          _
        $region56: #{pseudo_label_loss.3} parent=35 // pred_fallthru
          _
      $region36: #{pseudo_label_loss.3} parent=5 // pred_fallthru
        _
      %p450 = scmp.le.s32.totalorder 2, %s13
      // Predicated region
      $region57: #{pseudo_label_loss.3} parent=5 // pred_check
        %p451 = pneg %p450
      $region58: #{pseudo_label_loss.3} parent=5 // pred_check_branch
        %453 = sbr.rel (%p451) target = $region60
      $region59: #{pseudo_label_loss.3} parent=5 // pred_region
        %s454 = ssub.s32 %s13, 2
        // Predicated region
        $region61: #{pseudo_label_loss.3} parent=59 // pred_check
          %p455 = pneg %p159
        $region62: #{pseudo_label_loss.3} parent=59 // pred_check_branch
          %457 = sbr.rel (%p455) target = $region64
        $region63: #{pseudo_label_loss.3} parent=59 // pred_region
          %p458 = scmp.lt.s32.totalorder %s24, 1
          %s459 = scalar_select %p458, %s24, 1
          %s460 = scalar_lea.vmem %s4, %s459
        $region64: #{pseudo_label_loss.3} parent=59 // pred_fallthru
          _
        // Predicated region
        $region65: #{pseudo_label_loss.3} parent=59 // pred_check
          %p461 = pneg %p185
        $region66: #{pseudo_label_loss.3} parent=59 // pred_check_branch
          %463 = sbr.rel (%p461) target = $region68
        $region67: #{pseudo_label_loss.3} parent=59 // pred_region
          %p464 = scmp.lt.s32.totalorder %s24, 1
          %s465 = scalar_select %p464, %s24, 1
          %s466 = scalar_lea.vmem %s5, %s465
        $region68: #{pseudo_label_loss.3} parent=59 // pred_fallthru
          _
      $region60: #{pseudo_label_loss.3} parent=5 // pred_fallthru
        _
    $region6: #{pseudo_label_loss.3} parent=1 // loop_footer
      %s17 = sadd.s32 1, %s13
    $region7: #{pseudo_label_loss.3} parent=1 // loop_footer_branch
      %12 = sbr.rel target = $region3
    $region8: #{pseudo_label_loss.3} parent=1 // loop_exit
      _
    %467 = vsyncpa [#allocation5], 1
    %s468 = scalar_lea.sflag [#allocation5], 1
    %469 = vsyncpa %s468, 1

</llo_original>
